<compile_context>
chip_gen: v6e
topology: v6e:2x2x1
jax: 0.10.0
libtpu: 0.0.40
codegen_flags: <defaults>
</compile_context>

<pallas_src>
import functools
import math

import jax
import jax.numpy as jnp
from jax.experimental import pallas as pl
from jax.experimental.pallas import tpu as pltpu


def _temporal_conv_kernel(x_ref, w_ref, b_ref, o_ref, xs_ref, *,
                          Kt, c_in, T, Np, c_out, tb, act_func):
    # x_ref : (tb, c_in, T*Np)      one batch tile, NCHW flattened on (T, Np)
    # w_ref : (Kt, co_total, c_in)  conv weight per tap (resident)
    # b_ref : (co_total, 1)         bias (resident)
    # o_ref : (tb, co_out, T*Np)
    # xs_ref: (c_in, T*Np)          shifted-input staging scratch

    def one_batch(bb, carry):
        x_b = x_ref[bb]                                            # (c_in, T*Np)

        # Tap k = Kt-1 (shift z = 0): unshifted input, initializes the f32 accumulator.
        acc = jnp.dot(w_ref[Kt - 1], x_b,
                      preferred_element_type=jnp.float32)          # (co_total, T*Np)

        if Kt > 1:
            # Zero the causal head once per element; descending z keeps it zero thereafter.
            xs_ref[:, : (Kt - 1) * Np] = jnp.zeros((c_in, (Kt - 1) * Np), x_b.dtype)
            for z in range(Kt - 1, 0, -1):                         # z = causal shift (time steps)
                # xs[:, t*Np + n] = x[:, (t - z)*Np + n], zero for t < z.
                xs_ref[:, z * Np:] = x_b[:, : (T - z) * Np]
                acc = acc + jnp.dot(w_ref[Kt - 1 - z], xs_ref[...],
                                    preferred_element_type=jnp.float32)

        acc = acc + b_ref[...]                                     # bias broadcast over lanes

        if act_func == 'glu':
            y = acc[:c_out] * jax.nn.sigmoid(acc[c_out:])          # (c_out, T*Np)
        else:
            y = jnp.maximum(acc, 0.0)                              # ReLU on all conv channels

        o_ref[bb] = y.astype(o_ref.dtype)                          # lane-dense full-width store
        return carry

    if tb == 1:
        one_batch(0, 0)
    else:
        jax.lax.fori_loop(0, tb, one_batch, 0)                     # bounds live ranges per element


def temporal_conv_layer(x, conv_weight, conv_bias, *, Kt, c_out,
                        act_func='glu', block_b=None, compute_dtype=None):
    """x: (B, c_in, T, N) f32; conv_weight: (co_total, c_in, Kt, 1); conv_bias: (co_total,).
    Returns (B, c_out, T, N) for 'glu', else (B, co_total, T, N), matching the PyTorch module."""
    B, c_in, T, N = x.shape
    co_total = conv_weight.shape[0]
    assert conv_weight.shape == (co_total, c_in, Kt, 1)
    assert Kt <= T
    co_out = c_out if act_func == 'glu' else co_total

    # ---- lane padding: minimal Np >= N with (T*Np) % 128 == 0 (lane-dense stores) ----
    step = 128 // math.gcd(T, 128)
    Np = ((N + step - 1) // step) * step
    TNp = T * Np
    if Np != N:
        x = jnp.pad(x, ((0, 0), (0, 0), (0, 0), (0, Np - N)))
    x_flat = x.reshape(B, c_in, TNp)                               # free trailing-dim reshape

    # (co_total, c_in, Kt, 1) -> (Kt, co_total, c_in): w_taps[k, o, i] = conv_weight[o, i, k, 0]
    w_taps = jnp.transpose(conv_weight[..., 0], (2, 0, 1))
    b2 = conv_bias.reshape(co_total, 1).astype(jnp.float32)

    if compute_dtype is not None:                                  # optional bf16 I/O for the matmul
        x_flat = x_flat.astype(compute_dtype)
        w_taps = w_taps.astype(compute_dtype)
    in_item = jnp.dtype(x_flat.dtype).itemsize

    # ---- per-generation VMEM budget (v7x: 64 MiB physical; v5e/v6e: 128 MiB) ----
    try:
        vmem_cap = int(pltpu.get_tpu_info().vmem_capacity_bytes)
    except Exception:
        vmem_cap = 64 * 1024 * 1024                                # conservative fallback
    budget = int(0.75 * vmem_cap)                                  # 48 MiB on v7x, 96 MiB on v5e/v6e

    def footprint(tb):
        return (2 * tb * c_in * TNp * in_item                      # x tile (double buffered)
                + 2 * tb * co_out * TNp * 4                        # out tile (double buffered)
                + 2 * (Kt * co_total * c_in * in_item + co_total * 4)   # resident params
                + c_in * TNp * in_item                             # xs staging scratch
                + 3 * co_total * TNp * 4)                          # acc / epilogue transients

    # ---- batch tiling: aim for >= min(B, 8) grid steps (pipelining, megacore) under budget ----
    if block_b is None:
        target_steps = min(B, 8)
        cands = [d for d in range(1, B + 1)
                 if B % d == 0 and B // d >= target_steps and footprint(d) <= 0.8 * budget]
        block_b = max(cands) if cands else 1
    assert B % block_b == 0
    grid = (B // block_b,)

    vmem_limit = int(min(budget, max(2 * footprint(block_b), 32 * 1024 * 1024)))

    flops = 2 * B * co_total * c_in * Kt * TNp
    transcendentals = B * c_out * TNp if act_func == 'glu' else 0
    bytes_accessed = (in_item * (B * c_in * TNp + Kt * co_total * c_in)
                      + 4 * co_total + 4 * B * co_out * TNp)

    kernel = functools.partial(
        _temporal_conv_kernel, Kt=Kt, c_in=c_in, T=T, Np=Np, c_out=c_out,
        tb=block_b, act_func=act_func)

    out = pl.pallas_call(
        kernel,
        out_shape=jax.ShapeDtypeStruct((B, co_out, TNp), jnp.float32),
        grid_spec=pltpu.PrefetchScalarGridSpec(
            num_scalar_prefetch=0,
            grid=grid,
            in_specs=[
                pl.BlockSpec((block_b, c_in, TNp), lambda m: (m, 0, 0)),
                pl.BlockSpec((Kt, co_total, c_in), lambda m: (0, 0, 0)),   # resident weights
                pl.BlockSpec((co_total, 1), lambda m: (0, 0)),             # resident bias
            ],
            out_specs=pl.BlockSpec((block_b, co_out, TNp), lambda m: (m, 0, 0)),
            scratch_shapes=[pltpu.VMEM((c_in, TNp), x_flat.dtype)],        # shifted-input staging
        ),
        compiler_params=pltpu.CompilerParams(
            dimension_semantics=("parallel",),
            vmem_limit_bytes=vmem_limit),
        cost_estimate=pl.CostEstimate(
            flops=flops, transcendentals=transcendentals,
            bytes_accessed=bytes_accessed),
    )(x_flat, w_taps, b2)

    out = out.reshape(B, co_out, T, Np)
    if Np != N:
        out = out[..., :N]
    return out


def init_conv_params(key, c_in, c_out, Kt, act_func):
    """Deterministic init mirroring nn.Conv2d defaults (uniform +-1/sqrt(fan_in))."""
    co_total = 2 * c_out if act_func in ('glu', 'gtu') else c_out
    kw, kb = jax.random.split(key)
    fan_in = c_in * Kt
    bound = 1.0 / math.sqrt(fan_in)
    w = jax.random.uniform(kw, (co_total, c_in, Kt, 1), jnp.float32,
                           minval=-bound, maxval=bound)
    b = jax.random.uniform(kb, (co_total,), jnp.float32,
                           minval=-bound, maxval=bound)
    return w, b


if __name__ == "__main__":
    key = jax.random.PRNGKey(0)
    k_x, k_p = jax.random.split(key)

    # batch=2, channels=4, seq(T)=8, n_vertex(N)=16, hidden(c_out)=32, Kt=3
    B, c_in, T, N = 2, 4, 8, 16
    c_out, Kt = 32, 3

    x = jax.random.normal(k_x, (B, c_in, T, N), jnp.float32)

    def reference(x, w, b, act_func):
        # Plain-JAX reference of the PyTorch forward (causal conv + activation; Align(x) is unused).
        xp = jnp.pad(x, ((0, 0), (0, 0), (Kt - 1, 0), (0, 0)))
        conv = jax.lax.conv_general_dilated(
            xp, w, window_strides=(1, 1), padding='VALID',
            dimension_numbers=('NCHW', 'OIHW', 'NCHW')) + b.reshape(1, -1, 1, 1)
        if act_func == 'glu':
            return conv[:, :c_out] * jax.nn.sigmoid(conv[:, -c_out:])
        return jnp.maximum(conv, 0.0)

    for act_func in ('glu', 'relu'):
        w_conv, b_conv = init_conv_params(k_p, c_in, c_out, Kt, act_func)
        out = temporal_conv_layer(x, w_conv, b_conv, Kt=Kt, c_out=c_out, act_func=act_func)
        jax.block_until_ready(out)
        ref = reference(x, w_conv, b_conv, act_func)
        assert out.shape == ref.shape, (act_func, out.shape, ref.shape)
        assert jnp.allclose(out, ref, atol=1e-4, rtol=1e-4), act_func

    print("KERNEL_OK")
</pallas_src>

<mosaic_0001>
module attributes {stable_mosaic.version = 11 : i64} {
  func.func @_temporal_conv_kernel(%arg0: i32, %arg1: memref<1x4x128xf32, #tpu.memory_space<vmem>>, %arg2: memref<3x64x4xf32, #tpu.memory_space<vmem>>, %arg3: memref<64x1xf32, #tpu.memory_space<vmem>>, %arg4: memref<1x32x128xf32, #tpu.memory_space<vmem>>, %arg5: memref<4x128xf32, #tpu.memory_space<vmem>>) attributes {dimension_semantics = [#tpu.dimension_semantics<parallel>], iteration_bounds = array<i64: 2>, scalar_prefetch = 0 : i64, scratch_operands = 1 : i64, tpu.core_type = #tpu.core_type<tc>, window_params = [{transform_indices = @transform_0, window_bounds = array<i64: 1, 4, 128>}, {pipeline_mode = #tpu.pipeline_mode<synchronous>, transform_indices = @transform_1, window_bounds = array<i64: 3, 64, 4>}, {pipeline_mode = #tpu.pipeline_mode<synchronous>, transform_indices = @transform_2, window_bounds = array<i64: 64, 1>}, {transform_indices = @transform_3, window_bounds = array<i64: 1, 32, 128>}]} {
    %c0 = arith.constant 0 : index
    %c0_0 = arith.constant 0 : index
    %c0_1 = arith.constant 0 : index
    %0 = vector.load %arg1[%c0, %c0_0, %c0_1] : memref<1x4x128xf32, #tpu.memory_space<vmem>>, vector<1x4x128xf32>
    %1 = vector.shape_cast %0 : vector<1x4x128xf32> to vector<4x128xf32>
    %c2 = arith.constant 2 : index
    %c0_2 = arith.constant 0 : index
    %c0_3 = arith.constant 0 : index
    %2 = vector.load %arg2[%c2, %c0_2, %c0_3] : memref<3x64x4xf32, #tpu.memory_space<vmem>>, vector<1x64x4xf32>
    %3 = vector.shape_cast %2 : vector<1x64x4xf32> to vector<64x4xf32>
    %cst = arith.constant dense<0.000000e+00> : vector<64x128xf32>
    %4 = tpu.matmul %3, %1, %cst {dimension_numbers = #tpu.dot_dimension_numbers<[1], [0], [0], [1], [0, 0, 1, 1], [], []>} : vector<64x4xf32>, vector<4x128xf32>, vector<64x128xf32> -> vector<64x128xf32>
    %cst_4 = arith.constant 0.000000e+00 : f32
    %5 = vector.broadcast %cst_4 : f32 to vector<4x32xf32>
    %c0_5 = arith.constant 0 : index
    %c0_6 = arith.constant 0 : index
    %6 = vector.load %arg5[%c0_5, %c0_6] : memref<4x128xf32, #tpu.memory_space<vmem>>, vector<4x32xf32>
    tpu.vector_store %arg5[%c0_5, %c0_6], %5 {strides = array<i32>} : memref<4x128xf32, #tpu.memory_space<vmem>>, vector<4x32xf32>,
    %7 = vector.extract_strided_slice %1 {offsets = [0, 0], sizes = [4, 96], strides = [1, 1]} : vector<4x128xf32> to vector<4x96xf32>
    %c0_7 = arith.constant 0 : index
    %c32 = arith.constant 32 : index
    %8 = vector.load %arg5[%c0_7, %c32] : memref<4x128xf32, #tpu.memory_space<vmem>>, vector<4x96xf32>
    tpu.vector_store %arg5[%c0_7, %c32], %7 {strides = array<i32>} : memref<4x128xf32, #tpu.memory_space<vmem>>, vector<4x96xf32>,
    %c0_8 = arith.constant 0 : index
    %c0_9 = arith.constant 0 : index
    %c0_10 = arith.constant 0 : index
    %9 = vector.load %arg2[%c0_8, %c0_9, %c0_10] : memref<3x64x4xf32, #tpu.memory_space<vmem>>, vector<1x64x4xf32>
    %10 = vector.shape_cast %9 : vector<1x64x4xf32> to vector<64x4xf32>
    %c0_11 = arith.constant 0 : index
    %c0_12 = arith.constant 0 : index
    %11 = vector.load %arg5[%c0_11, %c0_12] : memref<4x128xf32, #tpu.memory_space<vmem>>, vector<4x128xf32>
    %cst_13 = arith.constant dense<0.000000e+00> : vector<64x128xf32>
    %12 = tpu.matmul %10, %11, %cst_13 {dimension_numbers = #tpu.dot_dimension_numbers<[1], [0], [0], [1], [0, 0, 1, 1], [], []>} : vector<64x4xf32>, vector<4x128xf32>, vector<64x128xf32> -> vector<64x128xf32>
    %13 = arith.addf %4, %12 : vector<64x128xf32>
    %14 = vector.extract_strided_slice %1 {offsets = [0, 0], sizes = [4, 112], strides = [1, 1]} : vector<4x128xf32> to vector<4x112xf32>
    %c0_14 = arith.constant 0 : index
    %c16 = arith.constant 16 : index
    %15 = vector.load %arg5[%c0_14, %c16] : memref<4x128xf32, #tpu.memory_space<vmem>>, vector<4x112xf32>
    tpu.vector_store %arg5[%c0_14, %c16], %14 {strides = array<i32>} : memref<4x128xf32, #tpu.memory_space<vmem>>, vector<4x112xf32>,
    %c1 = arith.constant 1 : index
    %c0_15 = arith.constant 0 : index
    %c0_16 = arith.constant 0 : index
    %16 = vector.load %arg2[%c1, %c0_15, %c0_16] : memref<3x64x4xf32, #tpu.memory_space<vmem>>, vector<1x64x4xf32>
    %17 = vector.shape_cast %16 : vector<1x64x4xf32> to vector<64x4xf32>
    %c0_17 = arith.constant 0 : index
    %c0_18 = arith.constant 0 : index
    %18 = vector.load %arg5[%c0_17, %c0_18] : memref<4x128xf32, #tpu.memory_space<vmem>>, vector<4x128xf32>
    %cst_19 = arith.constant dense<0.000000e+00> : vector<64x128xf32>
    %19 = tpu.matmul %17, %18, %cst_19 {dimension_numbers = #tpu.dot_dimension_numbers<[1], [0], [0], [1], [0, 0, 1, 1], [], []>} : vector<64x4xf32>, vector<4x128xf32>, vector<64x128xf32> -> vector<64x128xf32>
    %20 = arith.addf %13, %19 : vector<64x128xf32>
    %c0_20 = arith.constant 0 : index
    %c0_21 = arith.constant 0 : index
    %21 = vector.load %arg3[%c0_20, %c0_21] : memref<64x1xf32, #tpu.memory_space<vmem>>, vector<64x1xf32>
    %22 = vector.broadcast %21 : vector<64x1xf32> to vector<64x128xf32>
    %23 = arith.addf %20, %22 : vector<64x128xf32>
    %24 = vector.extract_strided_slice %23 {offsets = [0, 0], sizes = [32, 128], strides = [1, 1]} : vector<64x128xf32> to vector<32x128xf32>
    %25 = vector.extract_strided_slice %23 {offsets = [32, 0], sizes = [32, 128], strides = [1, 1]} : vector<64x128xf32> to vector<32x128xf32>
    %26 = arith.negf %25 : vector<32x128xf32>
    %27 = math.exp %26 : vector<32x128xf32>
    %cst_22 = arith.constant 1.000000e+00 : f32
    %28 = vector.broadcast %cst_22 : f32 to vector<32x128xf32>
    %29 = arith.addf %28, %27 : vector<32x128xf32>
    %30 = arith.divf %28, %29 : vector<32x128xf32>
    %31 = arith.mulf %24, %30 : vector<32x128xf32>
    %c0_23 = arith.constant 0 : index
    %c0_24 = arith.constant 0 : index
    %c0_25 = arith.constant 0 : index
    %32 = vector.load %arg4[%c0_23, %c0_24, %c0_25] : memref<1x32x128xf32, #tpu.memory_space<vmem>>, vector<1x32x128xf32>
    %33 = vector.shape_cast %32 : vector<1x32x128xf32> to vector<32x128xf32>
    %34 = vector.shape_cast %31 : vector<32x128xf32> to vector<1x32x128xf32>
    tpu.vector_store %arg4[%c0_23, %c0_24, %c0_25], %34 {strides = array<i32>} : memref<1x32x128xf32, #tpu.memory_space<vmem>>, vector<1x32x128xf32>,
    return
  }
  func.func @transform_0(%arg0: i32) -> (i32, i32, i32) {
    %c0_i32 = arith.constant 0 : i32
    %c0_i32_0 = arith.constant 0 : i32
    %c0_i32_1 = arith.constant 0 : i32
    return %arg0, %c0_i32, %c0_i32_0 : i32, i32, i32
  }
  func.func @transform_1(%arg0: i32) -> (i32, i32, i32) {
    %c0_i32 = arith.constant 0 : i32
    %c0_i32_0 = arith.constant 0 : i32
    %c0_i32_1 = arith.constant 0 : i32
    %c0_i32_2 = arith.constant 0 : i32
    return %c0_i32, %c0_i32_0, %c0_i32_1 : i32, i32, i32
  }
  func.func @transform_2(%arg0: i32) -> (i32, i32) {
    %c0_i32 = arith.constant 0 : i32
    %c0_i32_0 = arith.constant 0 : i32
    %c0_i32_1 = arith.constant 0 : i32
    return %c0_i32, %c0_i32_0 : i32, i32
  }
  func.func @transform_3(%arg0: i32) -> (i32, i32, i32) {
    %c0_i32 = arith.constant 0 : i32
    %c0_i32_0 = arith.constant 0 : i32
    %c0_i32_1 = arith.constant 0 : i32
    return %arg0, %c0_i32, %c0_i32_0 : i32, i32, i32
  }
}

</mosaic_0001>

<llo_original>
// kernel: tpu_custom_call.1
$region0: #{tpu_custom_call.1}
  #allocation0 [shape = 'u32[]', space=smem, size = 0x4, offset = 0x4, fixed_abs, tag = 'smem constant byte address 0x4 - core index']
  #allocation1 [shape = 'u32[144,128]{1,0:T(1,128)}', space=vmem, size = 0x12000, scoped, tag = 'internal scratch']
  #allocation2 [shape = 'f32[4,128]{1,0:T(4,128)}', space=vmem, size = 0x800, scoped, tag = 'scratch operand']
  %s0 = inlined_call_operand.vmem [shape: f32[2,4,128], index: 0, kind: input, shape index: {}]
  %s1 = inlined_call_operand.vmem [shape: f32[3,64,4], index: 1, kind: input, shape index: {}]
  %s2 = inlined_call_operand.vmem [shape: f32[64,1], index: 2, kind: input, shape index: {}]
  %s3 = inlined_call_operand.hbm [shape: f32[2,32,128], index: 3, kind: output, shape index: {}]
  %s4 = sld [smem:[#allocation0]]
  $region45: #{tpu_custom_call.1} parent=0
    _
  %s6 = ssub.s32 1, %s4
  %s7 = scalar_select 0, %s6, %s4
  $region1: #{tpu_custom_call.1} parent=0
    #allocation3 [shape = 'u8[32768]{0}', space=vmem, size = 0x8000, scoped, tag = 'output window, operand 0']
    #allocation4 [shape = 's32[2]{0}', space=sflag, size = 0x8, scoped, tag = 'scoped memory for tpu_custom_call.1']
    %8 = vsyncpa [#allocation4], 0
    %s9 = scalar_lea.sflag [#allocation4], 1
    %10 = vsyncpa %s9, 0
    loop: start=0, step=1, limit=4
    $region2: #{tpu_custom_call.1} parent=1 // loop_pre_header
      _
    $region3: #{tpu_custom_call.1} parent=1 // loop_header
      %s12 = sphi 0, %s16
      %p13 = scmp.ge.s32.totalorder %s12, 4
      %s22 = sphi 0, %s24
      %s25 = sphi 0, %s22
      %s26 = sphi 0, %s25
      %s42 = sphi 0, %s26
      %s46 = sphi 0, %s46
      %s48 = sphi 0, %s46
      %s49 = sphi 0, %s48
      %s63 = sphi 0, %s49
      %s67 = sphi 0, %s67
      %s69 = sphi 0, %s67
      %s70 = sphi 0, %s69
      %s84 = sphi 0, %s70
      %s90 = sphi 0, %s92
      %s93 = sphi 0, %s90
      %s94 = sphi 0, %s93
      %s110 = sphi 0, %s94
    $region4: #{tpu_custom_call.1} parent=1 // loop_header_branch
      %15 = sbr.rel (%p13) target = $region8
    $region5: #{tpu_custom_call.1} parent=1 // loop_body
      %s17 = ssub.s32 %s12, 1
      %s18 = ssub.s32 %s12, 2
      %s19 = sadd.s32 %s12, 1
      %s20 = ssub.s32 %s12, %s19
      %p21 = scmp.eq.s32.totalorder %s20, 0
      %s23 = sadd.s32 %s22, 1
      %s24 = scalar_select %p21, %s22, %s23
      %p27 = pneg %p21
      %p28 = scmp.eq.s32.totalorder %s12, 1
      %p29 = por %p27, %p28
      %p30 = scmp.ne.s32.totalorder %s22, %s25
      %p31 = scmp.eq.s32.totalorder %s12, 0
      %p32 = por %p30, %p31
      %p33 = scmp.ne.s32.totalorder %s22, %s25
      %p34 = scmp.eq.s32.totalorder %s17, 1
      %p35 = por %p33, %p34
      %p36 = scmp.ne.s32.totalorder %s25, %s26
      %p37 = scmp.eq.s32.totalorder %s17, 0
      %p38 = por %p36, %p37
      %p39 = scmp.ne.s32.totalorder %s25, %s26
      %p40 = scmp.eq.s32.totalorder %s18, 1
      %p41 = por %p39, %p40
      %p43 = scmp.ne.s32.totalorder %s26, %s42
      %p44 = scmp.eq.s32.totalorder %s18, 0
      %p45 = por %p43, %p44
      %s47 = sadd.s32 %s46, 1
      %p50 = scmp.eq.s32.totalorder %s12, 1
      %p51 = scmp.ne.s32.totalorder %s46, %s48
      %p52 = scmp.eq.s32.totalorder %s12, 0
      %p53 = por %p51, %p52
      %p54 = scmp.ne.s32.totalorder %s46, %s48
      %p55 = scmp.eq.s32.totalorder %s17, 1
      %p56 = por %p54, %p55
      %p57 = scmp.ne.s32.totalorder %s48, %s49
      %p58 = scmp.eq.s32.totalorder %s17, 0
      %p59 = por %p57, %p58
      %p60 = scmp.ne.s32.totalorder %s48, %s49
      %p61 = scmp.eq.s32.totalorder %s18, 1
      %p62 = por %p60, %p61
      %p64 = scmp.ne.s32.totalorder %s49, %s63
      %p65 = scmp.eq.s32.totalorder %s18, 0
      %p66 = por %p64, %p65
      %s68 = sadd.s32 %s67, 1
      %p71 = scmp.eq.s32.totalorder %s12, 1
      %p72 = scmp.ne.s32.totalorder %s67, %s69
      %p73 = scmp.eq.s32.totalorder %s12, 0
      %p74 = por %p72, %p73
      %p75 = scmp.ne.s32.totalorder %s67, %s69
      %p76 = scmp.eq.s32.totalorder %s17, 1
      %p77 = por %p75, %p76
      %p78 = scmp.ne.s32.totalorder %s69, %s70
      %p79 = scmp.eq.s32.totalorder %s17, 0
      %p80 = por %p78, %p79
      %p81 = scmp.ne.s32.totalorder %s69, %s70
      %p82 = scmp.eq.s32.totalorder %s18, 1
      %p83 = por %p81, %p82
      %p85 = scmp.ne.s32.totalorder %s70, %s84
      %p86 = scmp.eq.s32.totalorder %s18, 0
      %p87 = por %p85, %p86
      %s88 = ssub.s32 %s12, %s19
      %p89 = scmp.eq.s32.totalorder %s88, 0
      %s91 = sadd.s32 %s90, 1
      %s92 = scalar_select %p89, %s90, %s91
      %p95 = pneg %p89
      %p96 = scmp.eq.s32.totalorder %s12, 1
      %p97 = por %p95, %p96
      %p98 = scmp.ne.s32.totalorder %s90, %s93
      %p99 = scmp.eq.s32.totalorder %s12, 0
      %p100 = por %p98, %p99
      %p101 = scmp.ne.s32.totalorder %s90, %s93
      %p102 = scmp.eq.s32.totalorder %s17, 1
      %p103 = por %p101, %p102
      %p104 = scmp.ne.s32.totalorder %s93, %s94
      %p105 = scmp.eq.s32.totalorder %s17, 0
      %p106 = por %p104, %p105
      %p107 = scmp.ne.s32.totalorder %s93, %s94
      %p108 = scmp.eq.s32.totalorder %s18, 1
      %p109 = por %p107, %p108
      %p111 = scmp.ne.s32.totalorder %s94, %s110
      %p112 = scmp.eq.s32.totalorder %s18, 0
      %p113 = por %p111, %p112
      %p114 = scmp.le.s32.totalorder 1, %s12
      %p115 = scmp.lt.s32.totalorder %s12, 3
      %p116 = pnand %p114, %p115
      %p117 = pneg %p116
      // Predicated region
      $region9: #{tpu_custom_call.1} parent=5 // pred_check
        _
      $region10: #{tpu_custom_call.1} parent=5 // pred_check_branch
        %119 = sbr.rel (%p116) target = $region12
      $region11: #{tpu_custom_call.1} parent=5 // pred_region
        %s120 = ssub.s32 %s12, 1
        // Predicated region
        $region13: #{tpu_custom_call.1} parent=11 // pred_check
          %p121 = pneg %p59
        $region14: #{tpu_custom_call.1} parent=11 // pred_check_branch
          %123 = sbr.rel (%p121) target = $region16
        $region15: #{tpu_custom_call.1} parent=11 // pred_region
          _
        $region16: #{tpu_custom_call.1} parent=11 // pred_fallthru
          _
        // Predicated region
        $region17: #{tpu_custom_call.1} parent=11 // pred_check
          %p124 = pneg %p80
        $region18: #{tpu_custom_call.1} parent=11 // pred_check_branch
          %126 = sbr.rel (%p124) target = $region20
        $region19: #{tpu_custom_call.1} parent=11 // pred_region
          _
        $region20: #{tpu_custom_call.1} parent=11 // pred_fallthru
          _
      $region12: #{tpu_custom_call.1} parent=5 // pred_fallthru
        _
      %p127 = scmp.lt.s32.totalorder %s12, 2
      // Predicated region
      $region21: #{tpu_custom_call.1} parent=5 // pred_check
        %p128 = pneg %p127
      $region22: #{tpu_custom_call.1} parent=5 // pred_check_branch
        %130 = sbr.rel (%p128) target = $region24
      $region23: #{tpu_custom_call.1} parent=5 // pred_region
        // Predicated region
        $region25: #{tpu_custom_call.1} parent=23 // pred_check
          %p131 = pneg %p32
        $region26: #{tpu_custom_call.1} parent=23 // pred_check_branch
          %133 = sbr.rel (%p131) target = $region28
        $region27: #{tpu_custom_call.1} parent=23 // pred_region
          %p134 = scmp.lt.s32.totalorder %s12, 1
          %s135 = scalar_select %p134, %s12, 1
          %s136 = smul.addr %s135, 4
          %s137 = scalar_lea.vmem %s0, %s136
        $region28: #{tpu_custom_call.1} parent=23 // pred_fallthru
          _
      $region24: #{tpu_custom_call.1} parent=5 // pred_fallthru
        _
      %p138 = scmp.le.s32.totalorder 1, %s12
      %p139 = scmp.lt.s32.totalorder %s12, 3
      %p140 = pnand %p138, %p139
      %p141 = pneg %p140
      // Predicated region
      $region29: #{tpu_custom_call.1} parent=5 // pred_check
        _
      $region30: #{tpu_custom_call.1} parent=5 // pred_check_branch
        %143 = sbr.rel (%p140) target = $region32
      $region31: #{tpu_custom_call.1} parent=5 // pred_region
        %s144 = ssub.s32 %s12, 1
        %p145 = scmp.lt.s32.totalorder %s17, 1
        %s146 = scalar_select %p145, %s17, 1
        %s147 = smul.addr %s146, 4
        %s148 = scalar_lea.vmem %s0, %s147
        %p149 = pneg %p38
        %p150 = pneg %p35
        %p151 = pneg %p59
        %p152 = pneg %p56
        %p153 = pneg %p80
        %p154 = pneg %p77
        %p155 = pneg %p106
        %p156 = pneg %p103
        %s157 = sand.u32 %s93, 1
        %s158 = scalar_lea.sflag [#allocation4], %s157
        %s159 = sand.u32 %s93, 1
        %s160 = smul.addr %s159, 32
        %s161 = scalar_lea.vmem [#allocation3], %s160
        %p162 = scmp.lt.s32.totalorder %s17, 1
        %s163 = scalar_select %p162, %s17, 1
        %s164 = smul.addr %s163, 4
        %s165 = scalar_lea.vmem %s0, %s164
        %v166 = vld [vmem:[%s165] sm:$0xf]
        %s167 = scalar_lea.vmem %s1, 128
        %v168 = vld [vmem:[%s167] sm:$0xff]
        %v169 = vld [vmem:[%s167 + $0x8] sm:$0xff]
        %v170 = vld [vmem:[%s167 + $0x10] sm:$0xff]
        %v171 = vld [vmem:[%s167 + $0x18] sm:$0xff]
        %v172 = vld [vmem:[%s167 + $0x20] sm:$0xff]
        %v173 = vld [vmem:[%s167 + $0x28] sm:$0xff]
        %v174 = vld [vmem:[%s167 + $0x30] sm:$0xff]
        %v175 = vld [vmem:[%s167 + $0x38] sm:$0xff]
        %vm176 = vcmask 257024
        %177 = vst.msk [vmem:[#allocation2] sm:$0xf] %vm176, 0.0
        %179 = vrot.lane.b32.xlu0 %v166, 32
        %v180 = vpop.permute.xlu0 %179
        %vm182 = vcmask 1043712
        %183 = vst.msk [vmem:[#allocation2] sm:$0xf] %vm182, %v180
        %v184 = vld [vmem:[%s1] sm:$0xff]
        %v185 = vld [vmem:[%s1 + $0x8] sm:$0xff]
        %v186 = vld [vmem:[%s1 + $0x10] sm:$0xff]
        %v187 = vld [vmem:[%s1 + $0x18] sm:$0xff]
        %v188 = vld [vmem:[%s1 + $0x20] sm:$0xff]
        %v189 = vld [vmem:[%s1 + $0x28] sm:$0xff]
        %v190 = vld [vmem:[%s1 + $0x30] sm:$0xff]
        %v191 = vld [vmem:[%s1 + $0x38] sm:$0xff]
        %v192 = vld [vmem:[#allocation2] sm:$0xf]
        %vm193 = vcmask 31744
        %v195 = vsel %vm193, %v184, 0
        %v198 = vsel %vm193, %v185, 0
        %v201 = vsel %vm193, %v186, 0
        %v204 = vsel %vm193, %v187, 0
        %v207 = vsel %vm193, %v188, 0
        %v210 = vsel %vm193, %v189, 0
        %v213 = vsel %vm193, %v190, 0
        %v216 = vsel %vm193, %v191, 0
        %vm218 = vcmask 1043456
        %v220 = vsel %vm218, %v192, 0
        %222 = vmatprep.subr.mxu0 0.0
        %223 = vmatpush1.msra.mxu0 0.0
        %224 = vmatprep.subr.mxu0 0.0
        %225 = vmatpush1.msra.mxu0 0.0
        %226 = vmatprep.subr.mxu0 0.0
        %227 = vmatpush1.msra.mxu0 0.0
        %228 = vmatprep.subr.mxu0 0.0
        %229 = vmatpush1.msra.mxu0 0.0
        %230 = vmatprep.subr.mxu0 0.0
        %231 = vmatpush1.msra.mxu0 0.0
        %232 = vmatprep.subr.mxu0 0.0
        %233 = vmatpush1.msra.mxu0 0.0
        %234 = vmatprep.subr.mxu0 0.0
        %235 = vmatpush1.msra.mxu0 0.0
        %236 = vmatprep.subr.mxu0 0.0
        %237 = vmatpush1.msra.mxu0 0.0
        %238 = vmatprep.subr.mxu0 0.0
        %239 = vmatpush1.msra.mxu0 0.0
        %240 = vmatprep.subr.mxu0 0.0
        %241 = vmatpush1.msra.mxu0 0.0
        %242 = vmatprep.subr.mxu0 0.0
        %243 = vmatpush1.msra.mxu0 0.0
        %244 = vmatprep.subr.mxu0 0.0
        %245 = vmatpush1.msra.mxu0 0.0
        %246 = vmatprep.subr.mxu0 0.0
        %247 = vmatpush1.msra.mxu0 0.0
        %248 = vmatprep.subr.mxu0 0.0
        %249 = vmatpush1.msra.mxu0 0.0
        %250 = vmatprep.subr.mxu0 0.0
        %251 = vmatpush1.msra.mxu0 0.0
        %252 = vmatprep.subr.mxu0 0.0
        %253 = vmatpush1.msra.mxu0 %v220
        %254 = vmatprep.subr.mxu0 0.0
        %255 = vmatpush2.msra.mxu0 0.0
        %256 = vmatprep.subr.mxu0 0.0
        %257 = vmatpush2.msra.mxu0 0.0
        %258 = vmatprep.subr.mxu0 0.0
        %259 = vmatpush2.msra.mxu0 0.0
        %260 = vmatprep.subr.mxu0 0.0
        %261 = vmatpush2.msra.mxu0 0.0
        %262 = vmatprep.subr.mxu0 0.0
        %263 = vmatpush2.msra.mxu0 0.0
        %264 = vmatprep.subr.mxu0 0.0
        %265 = vmatpush2.msra.mxu0 0.0
        %266 = vmatprep.subr.mxu0 0.0
        %267 = vmatpush2.msra.mxu0 0.0
        %268 = vmatprep.subr.mxu0 0.0
        %269 = vmatpush2.msra.mxu0 0.0
        %270 = vmatprep.subr.mxu0 0.0
        %271 = vmatpush2.msra.mxu0 0.0
        %272 = vmatprep.subr.mxu0 0.0
        %273 = vmatpush2.msra.mxu0 0.0
        %274 = vmatprep.subr.mxu0 0.0
        %275 = vmatpush2.msra.mxu0 0.0
        %276 = vmatprep.subr.mxu0 0.0
        %277 = vmatpush2.msra.mxu0 0.0
        %278 = vmatprep.subr.mxu0 0.0
        %279 = vmatpush2.msra.mxu0 0.0
        %280 = vmatprep.subr.mxu0 0.0
        %281 = vmatpush2.msra.mxu0 0.0
        %282 = vmatprep.subr.mxu0 0.0
        %283 = vmatpush2.msra.mxu0 0.0
        %284 = vmatprep.subr.mxu0 0.0
        %285 = vmatpush2.msra.mxu0 0.0
        %286 = vmatprep.mubr.f32.mxu0 0.0
        %287 = vmatmul.mubr.f32.gmra.mxu0 %v195
        %v288 = vpop.f32.mrf.mxu0
        %v289 = vadd.f32 0.0, %v288
        %v290 = vpop.f32.mrf.mxu0
        %291 = vmatprep.mubr.f32.mxu0 0.0
        %292 = vmatmul.mubr.f32.gmra.mxu0 %v198
        %v293 = vpop.f32.mrf.mxu0
        %v294 = vadd.f32 0.0, %v293
        %v295 = vpop.f32.mrf.mxu0
        %296 = vmatprep.mubr.f32.mxu0 0.0
        %297 = vmatmul.mubr.f32.gmra.mxu0 %v201
        %v298 = vpop.f32.mrf.mxu0
        %v299 = vadd.f32 0.0, %v298
        %v300 = vpop.f32.mrf.mxu0
        %301 = vmatprep.mubr.f32.mxu0 0.0
        %302 = vmatmul.mubr.f32.gmra.mxu0 %v204
        %v303 = vpop.f32.mrf.mxu0
        %v304 = vadd.f32 0.0, %v303
        %v305 = vpop.f32.mrf.mxu0
        %306 = vmatprep.mubr.f32.mxu0 0.0
        %307 = vmatmul.mubr.f32.gmra.mxu0 %v207
        %v308 = vpop.f32.mrf.mxu0
        %v309 = vadd.f32 0.0, %v308
        %v310 = vpop.f32.mrf.mxu0
        %311 = vmatprep.mubr.f32.mxu0 0.0
        %312 = vmatmul.mubr.f32.gmra.mxu0 %v210
        %v313 = vpop.f32.mrf.mxu0
        %v314 = vadd.f32 0.0, %v313
        %v315 = vpop.f32.mrf.mxu0
        %316 = vmatprep.mubr.f32.mxu0 0.0
        %317 = vmatmul.mubr.f32.gmra.mxu0 %v213
        %v318 = vpop.f32.mrf.mxu0
        %v319 = vadd.f32 0.0, %v318
        %v320 = vpop.f32.mrf.mxu0
        %321 = vmatprep.mubr.f32.mxu0 0.0
        %322 = vmatmul.mubr.f32.gmra.mxu0 %v216
        %v323 = vpop.f32.mrf.mxu0
        %v324 = vadd.f32 0.0, %v323
        %v325 = vpop.f32.mrf.mxu0
        %326 = vdwg.mxu0
        %v328 = vsel %vm193, %v168, 0
        %v331 = vsel %vm193, %v169, 0
        %v334 = vsel %vm193, %v170, 0
        %v337 = vsel %vm193, %v171, 0
        %v340 = vsel %vm193, %v172, 0
        %v343 = vsel %vm193, %v173, 0
        %v346 = vsel %vm193, %v174, 0
        %v349 = vsel %vm193, %v175, 0
        %v351 = vsel %vm218, %v166, 0
        %353 = vmatprep.subr.mxu0 0.0
        %354 = vmatpush1.msra.mxu0 0.0
        %355 = vmatprep.subr.mxu0 0.0
        %356 = vmatpush1.msra.mxu0 0.0
        %357 = vmatprep.subr.mxu0 0.0
        %358 = vmatpush1.msra.mxu0 0.0
        %359 = vmatprep.subr.mxu0 0.0
        %360 = vmatpush1.msra.mxu0 0.0
        %361 = vmatprep.subr.mxu0 0.0
        %362 = vmatpush1.msra.mxu0 0.0
        %363 = vmatprep.subr.mxu0 0.0
        %364 = vmatpush1.msra.mxu0 0.0
        %365 = vmatprep.subr.mxu0 0.0
        %366 = vmatpush1.msra.mxu0 0.0
        %367 = vmatprep.subr.mxu0 0.0
        %368 = vmatpush1.msra.mxu0 0.0
        %369 = vmatprep.subr.mxu0 0.0
        %370 = vmatpush1.msra.mxu0 0.0
        %371 = vmatprep.subr.mxu0 0.0
        %372 = vmatpush1.msra.mxu0 0.0
        %373 = vmatprep.subr.mxu0 0.0
        %374 = vmatpush1.msra.mxu0 0.0
        %375 = vmatprep.subr.mxu0 0.0
        %376 = vmatpush1.msra.mxu0 0.0
        %377 = vmatprep.subr.mxu0 0.0
        %378 = vmatpush1.msra.mxu0 0.0
        %379 = vmatprep.subr.mxu0 0.0
        %380 = vmatpush1.msra.mxu0 0.0
        %381 = vmatprep.subr.mxu0 0.0
        %382 = vmatpush1.msra.mxu0 0.0
        %383 = vmatprep.subr.mxu0 0.0
        %384 = vmatpush1.msra.mxu0 %v351
        %385 = vmatprep.subr.mxu0 0.0
        %386 = vmatpush2.msra.mxu0 0.0
        %387 = vmatprep.subr.mxu0 0.0
        %388 = vmatpush2.msra.mxu0 0.0
        %389 = vmatprep.subr.mxu0 0.0
        %390 = vmatpush2.msra.mxu0 0.0
        %391 = vmatprep.subr.mxu0 0.0
        %392 = vmatpush2.msra.mxu0 0.0
        %393 = vmatprep.subr.mxu0 0.0
        %394 = vmatpush2.msra.mxu0 0.0
        %395 = vmatprep.subr.mxu0 0.0
        %396 = vmatpush2.msra.mxu0 0.0
        %397 = vmatprep.subr.mxu0 0.0
        %398 = vmatpush2.msra.mxu0 0.0
        %399 = vmatprep.subr.mxu0 0.0
        %400 = vmatpush2.msra.mxu0 0.0
        %401 = vmatprep.subr.mxu0 0.0
        %402 = vmatpush2.msra.mxu0 0.0
        %403 = vmatprep.subr.mxu0 0.0
        %404 = vmatpush2.msra.mxu0 0.0
        %405 = vmatprep.subr.mxu0 0.0
        %406 = vmatpush2.msra.mxu0 0.0
        %407 = vmatprep.subr.mxu0 0.0
        %408 = vmatpush2.msra.mxu0 0.0
        %409 = vmatprep.subr.mxu0 0.0
        %410 = vmatpush2.msra.mxu0 0.0
        %411 = vmatprep.subr.mxu0 0.0
        %412 = vmatpush2.msra.mxu0 0.0
        %413 = vmatprep.subr.mxu0 0.0
        %414 = vmatpush2.msra.mxu0 0.0
        %415 = vmatprep.subr.mxu0 0.0
        %416 = vmatpush2.msra.mxu0 0.0
        %417 = vmatprep.mubr.f32.mxu0 0.0
        %418 = vmatmul.mubr.f32.gmra.mxu0 %v328
        %v419 = vpop.f32.mrf.mxu0
        %v420 = vadd.f32 %v289, %v419
        %v421 = vpop.f32.mrf.mxu0
        %422 = vmatprep.mubr.f32.mxu0 0.0
        %423 = vmatmul.mubr.f32.gmra.mxu0 %v331
        %v424 = vpop.f32.mrf.mxu0
        %v425 = vadd.f32 %v294, %v424
        %v426 = vpop.f32.mrf.mxu0
        %427 = vmatprep.mubr.f32.mxu0 0.0
        %428 = vmatmul.mubr.f32.gmra.mxu0 %v334
        %v429 = vpop.f32.mrf.mxu0
        %v430 = vadd.f32 %v299, %v429
        %v431 = vpop.f32.mrf.mxu0
        %432 = vmatprep.mubr.f32.mxu0 0.0
        %433 = vmatmul.mubr.f32.gmra.mxu0 %v337
        %v434 = vpop.f32.mrf.mxu0
        %v435 = vadd.f32 %v304, %v434
        %v436 = vpop.f32.mrf.mxu0
        %437 = vmatprep.mubr.f32.mxu0 0.0
        %438 = vmatmul.mubr.f32.gmra.mxu0 %v340
        %v439 = vpop.f32.mrf.mxu0
        %v440 = vadd.f32 %v309, %v439
        %v441 = vpop.f32.mrf.mxu0
        %442 = vmatprep.mubr.f32.mxu0 0.0
        %443 = vmatmul.mubr.f32.gmra.mxu0 %v343
        %v444 = vpop.f32.mrf.mxu0
        %v445 = vadd.f32 %v314, %v444
        %v446 = vpop.f32.mrf.mxu0
        %447 = vmatprep.mubr.f32.mxu0 0.0
        %448 = vmatmul.mubr.f32.gmra.mxu0 %v346
        %v449 = vpop.f32.mrf.mxu0
        %v450 = vadd.f32 %v319, %v449
        %v451 = vpop.f32.mrf.mxu0
        %452 = vmatprep.mubr.f32.mxu0 0.0
        %453 = vmatmul.mubr.f32.gmra.mxu0 %v349
        %v454 = vpop.f32.mrf.mxu0
        %v455 = vadd.f32 %v324, %v454
        %v456 = vpop.f32.mrf.mxu0
        %457 = vdwg.mxu0
        %458 = vrot.lane.b32.xlu0 %v166, 16
        %v459 = vpop.permute.xlu0 %458
        %vm461 = vcmask 1043584
        %462 = vst.msk [vmem:[#allocation2] sm:$0xf] %vm461, %v459
        %s463 = scalar_lea.vmem %s1, 64
        %v464 = vld [vmem:[%s463] sm:$0xff]
        %v465 = vld [vmem:[%s463 + $0x8] sm:$0xff]
        %v466 = vld [vmem:[%s463 + $0x10] sm:$0xff]
        %v467 = vld [vmem:[%s463 + $0x18] sm:$0xff]
        %v468 = vld [vmem:[%s463 + $0x20] sm:$0xff]
        %v469 = vld [vmem:[%s463 + $0x28] sm:$0xff]
        %v470 = vld [vmem:[%s463 + $0x30] sm:$0xff]
        %v471 = vld [vmem:[%s463 + $0x38] sm:$0xff]
        %v472 = vld [vmem:[#allocation2] sm:$0xf]
        %v474 = vsel %vm193, %v464, 0
        %v477 = vsel %vm193, %v465, 0
        %v480 = vsel %vm193, %v466, 0
        %v483 = vsel %vm193, %v467, 0
        %v486 = vsel %vm193, %v468, 0
        %v489 = vsel %vm193, %v469, 0
        %v492 = vsel %vm193, %v470, 0
        %v495 = vsel %vm193, %v471, 0
        %v498 = vsel %vm218, %v472, 0
        %500 = vmatprep.subr.mxu0 0.0
        %501 = vmatpush1.msra.mxu0 0.0
        %502 = vmatprep.subr.mxu0 0.0
        %503 = vmatpush1.msra.mxu0 0.0
        %504 = vmatprep.subr.mxu0 0.0
        %505 = vmatpush1.msra.mxu0 0.0
        %506 = vmatprep.subr.mxu0 0.0
        %507 = vmatpush1.msra.mxu0 0.0
        %508 = vmatprep.subr.mxu0 0.0
        %509 = vmatpush1.msra.mxu0 0.0
        %510 = vmatprep.subr.mxu0 0.0
        %511 = vmatpush1.msra.mxu0 0.0
        %512 = vmatprep.subr.mxu0 0.0
        %513 = vmatpush1.msra.mxu0 0.0
        %514 = vmatprep.subr.mxu0 0.0
        %515 = vmatpush1.msra.mxu0 0.0
        %516 = vmatprep.subr.mxu0 0.0
        %517 = vmatpush1.msra.mxu0 0.0
        %518 = vmatprep.subr.mxu0 0.0
        %519 = vmatpush1.msra.mxu0 0.0
        %520 = vmatprep.subr.mxu0 0.0
        %521 = vmatpush1.msra.mxu0 0.0
        %522 = vmatprep.subr.mxu0 0.0
        %523 = vmatpush1.msra.mxu0 0.0
        %524 = vmatprep.subr.mxu0 0.0
        %525 = vmatpush1.msra.mxu0 0.0
        %526 = vmatprep.subr.mxu0 0.0
        %527 = vmatpush1.msra.mxu0 0.0
        %528 = vmatprep.subr.mxu0 0.0
        %529 = vmatpush1.msra.mxu0 0.0
        %530 = vmatprep.subr.mxu0 0.0
        %531 = vmatpush1.msra.mxu0 %v498
        %532 = vmatprep.subr.mxu0 0.0
        %533 = vmatpush2.msra.mxu0 0.0
        %534 = vmatprep.subr.mxu0 0.0
        %535 = vmatpush2.msra.mxu0 0.0
        %536 = vmatprep.subr.mxu0 0.0
        %537 = vmatpush2.msra.mxu0 0.0
        %538 = vmatprep.subr.mxu0 0.0
        %539 = vmatpush2.msra.mxu0 0.0
        %540 = vmatprep.subr.mxu0 0.0
        %541 = vmatpush2.msra.mxu0 0.0
        %542 = vmatprep.subr.mxu0 0.0
        %543 = vmatpush2.msra.mxu0 0.0
        %544 = vmatprep.subr.mxu0 0.0
        %545 = vmatpush2.msra.mxu0 0.0
        %546 = vmatprep.subr.mxu0 0.0
        %547 = vmatpush2.msra.mxu0 0.0
        %548 = vmatprep.subr.mxu0 0.0
        %549 = vmatpush2.msra.mxu0 0.0
        %550 = vmatprep.subr.mxu0 0.0
        %551 = vmatpush2.msra.mxu0 0.0
        %552 = vmatprep.subr.mxu0 0.0
        %553 = vmatpush2.msra.mxu0 0.0
        %554 = vmatprep.subr.mxu0 0.0
        %555 = vmatpush2.msra.mxu0 0.0
        %556 = vmatprep.subr.mxu0 0.0
        %557 = vmatpush2.msra.mxu0 0.0
        %558 = vmatprep.subr.mxu0 0.0
        %559 = vmatpush2.msra.mxu0 0.0
        %560 = vmatprep.subr.mxu0 0.0
        %561 = vmatpush2.msra.mxu0 0.0
        %562 = vmatprep.subr.mxu0 0.0
        %563 = vmatpush2.msra.mxu0 0.0
        %564 = vmatprep.mubr.f32.mxu0 0.0
        %565 = vmatmul.mubr.f32.gmra.mxu0 %v474
        %v566 = vpop.f32.mrf.mxu0
        %v567 = vadd.f32 0.0, %v566
        %v568 = vpop.f32.mrf.mxu0
        %569 = vmatprep.mubr.f32.mxu0 0.0
        %570 = vmatmul.mubr.f32.gmra.mxu0 %v477
        %v571 = vpop.f32.mrf.mxu0
        %v572 = vadd.f32 0.0, %v571
        %v573 = vpop.f32.mrf.mxu0
        %574 = vmatprep.mubr.f32.mxu0 0.0
        %575 = vmatmul.mubr.f32.gmra.mxu0 %v480
        %v576 = vpop.f32.mrf.mxu0
        %v577 = vadd.f32 0.0, %v576
        %v578 = vpop.f32.mrf.mxu0
        %579 = vmatprep.mubr.f32.mxu0 0.0
        %580 = vmatmul.mubr.f32.gmra.mxu0 %v483
        %v581 = vpop.f32.mrf.mxu0
        %v582 = vadd.f32 0.0, %v581
        %v583 = vpop.f32.mrf.mxu0
        %584 = vmatprep.mubr.f32.mxu0 0.0
        %585 = vmatmul.mubr.f32.gmra.mxu0 %v486
        %v586 = vpop.f32.mrf.mxu0
        %v587 = vadd.f32 0.0, %v586
        %v588 = vpop.f32.mrf.mxu0
        %589 = vmatprep.mubr.f32.mxu0 0.0
        %590 = vmatmul.mubr.f32.gmra.mxu0 %v489
        %v591 = vpop.f32.mrf.mxu0
        %v592 = vadd.f32 0.0, %v591
        %v593 = vpop.f32.mrf.mxu0
        %594 = vmatprep.mubr.f32.mxu0 0.0
        %595 = vmatmul.mubr.f32.gmra.mxu0 %v492
        %v596 = vpop.f32.mrf.mxu0
        %v597 = vadd.f32 0.0, %v596
        %v598 = vpop.f32.mrf.mxu0
        %599 = vmatprep.mubr.f32.mxu0 0.0
        %600 = vmatmul.mubr.f32.gmra.mxu0 %v495
        %v601 = vpop.f32.mrf.mxu0
        %v602 = vadd.f32 0.0, %v601
        %v603 = vpop.f32.mrf.mxu0
        %604 = vdwg.mxu0
        %v605 = vadd.f32 %v420, %v567
        %v606 = vadd.f32 %v425, %v572
        %v607 = vadd.f32 %v430, %v577
        %v608 = vadd.f32 %v435, %v582
        %v609 = vadd.f32 %v440, %v587
        %v610 = vadd.f32 %v445, %v592
        %v611 = vadd.f32 %v450, %v597
        %v612 = vadd.f32 %v455, %v602
        %v613 = vld [vmem:[%s2] sm:$0xff]
        %v614 = vld [vmem:[%s2 + $0x8] sm:$0xff]
        %v615 = vld [vmem:[%s2 + $0x10] sm:$0xff]
        %v616 = vld [vmem:[%s2 + $0x18] sm:$0xff]
        %v617 = vld [vmem:[%s2 + $0x20] sm:$0xff]
        %v618 = vld [vmem:[%s2 + $0x28] sm:$0xff]
        %v619 = vld [vmem:[%s2 + $0x30] sm:$0xff]
        %v620 = vld [vmem:[%s2 + $0x38] sm:$0xff]
        %622 = vset.pattern.permute.xlu0 0
        %623 = vperm.xlu0 %622, %v613
        %v624 = vpop.permute.xlu0 %623
        %627 = vset.pattern.permute.xlu0 0
        %628 = vperm.xlu0 %627, %v614
        %v629 = vpop.permute.xlu0 %628
        %632 = vset.pattern.permute.xlu0 0
        %633 = vperm.xlu0 %632, %v615
        %v634 = vpop.permute.xlu0 %633
        %637 = vset.pattern.permute.xlu0 0
        %638 = vperm.xlu0 %637, %v616
        %v639 = vpop.permute.xlu0 %638
        %642 = vset.pattern.permute.xlu0 0
        %643 = vperm.xlu0 %642, %v617
        %v644 = vpop.permute.xlu0 %643
        %647 = vset.pattern.permute.xlu0 0
        %648 = vperm.xlu0 %647, %v618
        %v649 = vpop.permute.xlu0 %648
        %652 = vset.pattern.permute.xlu0 0
        %653 = vperm.xlu0 %652, %v619
        %v654 = vpop.permute.xlu0 %653
        %657 = vset.pattern.permute.xlu0 0
        %658 = vperm.xlu0 %657, %v620
        %v659 = vpop.permute.xlu0 %658
        %v661 = vadd.f32 %v605, %v624
        %v662 = vadd.f32 %v606, %v629
        %v663 = vadd.f32 %v607, %v634
        %v664 = vadd.f32 %v608, %v639
        %v665 = vadd.f32 %v609, %v644
        %v666 = vadd.f32 %v610, %v649
        %v667 = vadd.f32 %v611, %v654
        %v668 = vadd.f32 %v612, %v659
        %v669 = vxor.u32 %v665, 2147483648
        %v670 = vxor.u32 %v666, 2147483648
        %v671 = vxor.u32 %v667, 2147483648
        %v672 = vxor.u32 %v668, 2147483648
        %v673 = vmul.f32 %v669, 1.442695
        %v674 = vpow.pop %v673
        %v675 = vmul.f32 %v670, 1.442695
        %v676 = vpow.pop %v675
        %v677 = vmul.f32 %v671, 1.442695
        %v678 = vpow.pop %v677
        %v679 = vmul.f32 %v672, 1.442695
        %v680 = vpow.pop %v679
        %v681 = vadd.f32 %v674, 1.0
        %v682 = vadd.f32 %v676, 1.0
        %v683 = vadd.f32 %v678, 1.0
        %v684 = vadd.f32 %v680, 1.0
        %v685 = vrcp.pop %v681
        %v686 = vmul.f32 1.0, %v685
        %v687 = vrcp.pop %v682
        %v688 = vmul.f32 1.0, %v687
        %v689 = vrcp.pop %v683
        %v690 = vmul.f32 1.0, %v689
        %v691 = vrcp.pop %v684
        %v692 = vmul.f32 1.0, %v691
        %v693 = vmul.f32 %v661, %v686
        %v694 = vmul.f32 %v662, %v688
        %v695 = vmul.f32 %v663, %v690
        %v696 = vmul.f32 %v664, %v692
        %697 = vst [vmem:[%s161] sm:$0xff] %v693
        %698 = vst [vmem:[%s161 + $0x8] sm:$0xff] %v694
        %699 = vst [vmem:[%s161 + $0x10] sm:$0xff] %v695
        %700 = vst [vmem:[%s161 + $0x18] sm:$0xff] %v696
        %s701 = sand.u32 %s93, 1
        %s702 = scalar_lea.sflag [#allocation4], %s701
        %s703 = sand.u32 %s93, 1
        %s704 = smul.addr %s703, 32
        %s705 = scalar_lea.vmem [#allocation3], %s704
        // Predicated region
        $region33: #{tpu_custom_call.1} parent=31 // pred_check
          %p706 = pneg %p103
        $region34: #{tpu_custom_call.1} parent=31 // pred_check_branch
          %708 = sbr.rel (%p706) target = $region36
        $region35: #{tpu_custom_call.1} parent=31 // pred_region
          %s710 = ssub.s32 512, 512
          %711 = vsyncadd %s702, %s710
          %s712 = smul.addr %s17, 4
          %s713 = smul.addr %s712, 128
          %s714 = scalar_lea.hbm %s3, %s713
          %s715 = sshll.u32 %s705, 4
          %s716 = int_to_ptr.vmem [resolvable:$true] %s715
          %721 = dma.vmem_to_hbm [thread:$0]  %s716, 512, %s714, %s702, 128, 128, 8
        $region36: #{tpu_custom_call.1} parent=31 // pred_fallthru
          _
      $region32: #{tpu_custom_call.1} parent=5 // pred_fallthru
        _
      %p722 = scmp.le.s32.totalorder 2, %s12
      // Predicated region
      $region37: #{tpu_custom_call.1} parent=5 // pred_check
        %p723 = pneg %p722
      $region38: #{tpu_custom_call.1} parent=5 // pred_check_branch
        %725 = sbr.rel (%p723) target = $region40
      $region39: #{tpu_custom_call.1} parent=5 // pred_region
        %s726 = ssub.s32 %s12, 2
        // Predicated region
        $region41: #{tpu_custom_call.1} parent=39 // pred_check
          %p727 = pneg %p109
        $region42: #{tpu_custom_call.1} parent=39 // pred_check_branch
          %729 = sbr.rel (%p727) target = $region44
        $region43: #{tpu_custom_call.1} parent=39 // pred_region
          %s730 = sand.u32 %s94, 1
          %s731 = scalar_lea.sflag [#allocation4], %s730
          %s732 = sand.u32 %s94, 1
          %s733 = smul.addr %s732, 32
          %s734 = scalar_lea.vmem [#allocation3], %s733
          %735 = dma.done %s731, 512
        $region44: #{tpu_custom_call.1} parent=39 // pred_fallthru
          _
      $region40: #{tpu_custom_call.1} parent=5 // pred_fallthru
        _
    $region6: #{tpu_custom_call.1} parent=1 // loop_footer
      %s16 = sadd.s32 1, %s12
    $region7: #{tpu_custom_call.1} parent=1 // loop_footer_branch
      %11 = sbr.rel target = $region3
    $region8: #{tpu_custom_call.1} parent=1 // loop_exit
      _
    %736 = vsyncpa [#allocation4], 1
    %s737 = scalar_lea.sflag [#allocation4], 1
    %738 = vsyncpa %s737, 1

</llo_original>
